<compile_context>
chip_gen: v7x
topology: tpu7x:2x2x1
jax: 0.10.0
libtpu: 0.0.40
codegen_flags: <defaults>
</compile_context>

<pallas_src>
import jax
import jax.numpy as jnp
from jax.experimental import pallas as pl
from jax.experimental.pallas import tpu as pltpu


def _cdiv(a, b):
    return -(-a // b)


def _pick_lane_width(n, lanes):
    """Largest multiple of 128 (<= lanes) that divides n exactly, else None."""
    bc = min(lanes, (n // 128) * 128)
    bc = (bc // 128) * 128
    while bc >= 128:
        if n % bc == 0:
            return bc
        bc -= 128
    return None


def _make_sum_kernel(n_in, num_sums, elem_fn, *, bc, br, slab_rows, rows,
                     total_blocks, inner, needs_guard, needs_mask):
    """Streaming-sum kernel.

    Inputs: n_in blocks of shape (br, bc) (any float dtype).  Outputs: num_sums
    lane-dense (8, bc) f32 blocks that double as accumulators — their BlockSpec
    index depends only on the parallel grid axis, so they stay resident in VMEM
    across the whole inner reduction axis.  The block is processed in
    (slab_rows, bc) slabs so intermediates stay in vregs.
    """
    n_sub = br // slab_rows
    n_chunks = slab_rows // 8

    def kernel(*refs):
        in_refs, out_refs = refs[:n_in], refs[n_in:]
        p = pl.program_id(0)
        i = pl.program_id(1)
        g = p * inner + i                       # global row-block index

        @pl.when(i == 0)
        def _init():
            for o in out_refs:
                o[...] = jnp.zeros_like(o)

        def _accumulate():
            accs = [jnp.zeros((8, bc), jnp.float32) for _ in range(num_sums)]
            base = g * br
            for s in range(n_sub):              # fully unrolled, static slices
                r0 = s * slab_rows
                slabs = tuple(r[r0:r0 + slab_rows, :].astype(jnp.float32)
                              for r in in_refs)
                vals = tuple(elem_fn(*slabs))
                if needs_mask:
                    # Only the (possibly OOB-padded) last block has invalid
                    # rows; select (not multiply) so garbage/NaN never leaks.
                    row_ids = base + r0 + jax.lax.broadcasted_iota(
                        jnp.int32, (slab_rows, bc), 0)
                    in_bounds = row_ids < rows
                    vals = tuple(jnp.where(in_bounds, v, 0.0) for v in vals)
                for k, v in enumerate(vals):
                    part = v[0:8, :]
                    for c in range(1, n_chunks):        # VPU tree-add -> (8,bc)
                        part = part + v[8 * c:8 * (c + 1), :]
                    accs[k] = accs[k] + part
            for o, a in zip(out_refs, accs):
                o[...] += a                      # one RMW of 8 vregs per step

        if needs_guard:
            pl.when(g < total_blocks)(_accumulate)
        else:
            _accumulate()

    return kernel


def _streaming_sums(elem_fn, arrays, num_sums, *, block_rows=512, lanes=1024,
                    parallel=2, min_pallas_elems=65536):
    """Global sums of per-element quantities over equally-sized arrays.

    Arrays are reshaped (free bitcast — no padding, no copies) to (rows, bc)
    with bc an exact divisor of n, and streamed block-by-block through one
    Pallas kernel.  `elem_fn` maps f32 blocks to `num_sums` per-element f32
    blocks.  Small / awkwardly-sized inputs fall back to a fused XLA reduction.
    Returns `num_sums` f32 scalars.
    """
    assert arrays, "need at least one input array"
    n = int(arrays[0].size)
    assert all(int(a.size) == n for a in arrays), "input size mismatch"
    assert lanes % 128 == 0 and lanes >= 128
    assert parallel >= 1

    def _xla_sums():
        vals = elem_fn(*(a.reshape(-1).astype(jnp.float32) for a in arrays))
        return tuple(jnp.sum(v) for v in vals)

    if n < min_pallas_elems:
        return _xla_sums()                      # tiny tensors: skip the launch

    bc = _pick_lane_width(n, lanes)
    if bc is None:
        # TODO(synk): n not a multiple of 128 would need a pad copy or a masked
        # 1-D tail; a fused XLA reduction is cheaper than re-streaming via pad.
        return _xla_sums()

    rows = n // bc
    # Sublane packing granularity of the narrowest input dtype (8/16/32).
    min_sub = max([8] + [32 // jnp.dtype(a.dtype).itemsize for a in arrays])
    factor = max(1, lanes // bc)                # keeps ~8 vregs/input per slab
    slab_rows = max(8 * factor, min_sub)
    br = _cdiv(max(block_rows, 8) * factor, slab_rows) * slab_rows
    if br > rows:
        br = (rows // slab_rows) * slab_rows
        if br == 0:                             # fewer rows than one slab
            return _xla_sums()

    total_blocks = _cdiv(rows, br)
    p_dim = max(1, min(parallel, total_blocks))  # v7x: 2 TensorCores
    inner = _cdiv(total_blocks, p_dim)
    needs_guard = p_dim * inner != total_blocks
    needs_mask = rows % br != 0

    # Free bitcast: bc divides n exactly -> no pad / slice copy is generated.
    mats = [a.reshape(rows, bc) for a in arrays]

    if needs_guard:
        # Clamp instead of rounding the array up: no padded blocks are DMA'd.
        in_index = lambda p, i: (jnp.minimum(p * inner + i, total_blocks - 1), 0)
    else:
        in_index = lambda p, i: (p * inner + i, 0)
    out_index = lambda p, i: (p, 0)

    kernel = _make_sum_kernel(
        len(arrays), num_sums, elem_fn, bc=bc, br=br, slab_rows=slab_rows,
        rows=rows, total_blocks=total_blocks, inner=inner,
        needs_guard=needs_guard, needs_mask=needs_mask)

    outs = pl.pallas_call(
        kernel,
        out_shape=tuple(jax.ShapeDtypeStruct((p_dim * 8, bc), jnp.float32)
                        for _ in range(num_sums)),
        grid_spec=pltpu.PrefetchScalarGridSpec(
            num_scalar_prefetch=0,
            grid=(p_dim, inner),
            in_specs=[pl.BlockSpec((br, bc), in_index) for _ in mats],
            out_specs=tuple(pl.BlockSpec((8, bc), out_index)
                            for _ in range(num_sums))),
        compiler_params=pltpu.CompilerParams(
            dimension_semantics=("parallel", "arbitrary"),
            vmem_limit_bytes=32 * 1024 * 1024),
    )(*mats)

    if not isinstance(outs, (list, tuple)):
        outs = (outs,)
    # Final tiny cross-lane reduce of the (p_dim*8, bc) partials in XLA.
    return tuple(jnp.sum(o) for o in outs)


def my_loss(inputs, reconstructions, posterior_mean, posterior_logvar, *,
            logvar=0.0, kl_weight=1.0, weights=None,
            block_rows=512, lanes=1024, parallel=2, min_pallas_elems=65536):
    """Forward pass of the PyTorch `My_loss` module via Pallas TPU kernels.

    `posteriors` is represented by its diagonal-Gaussian parameters
    (posterior_mean, posterior_logvar): posteriors.kl() is
    0.5 * sum(mean^2 + exp(logvar) - 1 - logvar) over non-batch dims.
    `logvar` is the module's scalar nn.Parameter.  `split`/`step` do not affect
    the returned loss and are omitted.  On v7x, pass block_rows=1024 (4 MiB f32
    tiles) for a few extra % of HBM roofline.
    """
    # TODO(synk): only DiagonalGaussianDistribution posteriors are supported;
    # other posterior types would need their own elementwise KL formula.
    layout = dict(block_rows=block_rows, lanes=lanes, parallel=parallel,
                  min_pallas_elems=min_pallas_elems)
    batch = inputs.shape[0]
    kl_batch = posterior_mean.shape[0]
    logvar = jnp.asarray(logvar, jnp.float32)
    inv_var = jnp.exp(-logvar)

    w = None if weights is None else jnp.asarray(weights)

    if w is None or w.size == 1:
        (sum_abs,) = _streaming_sums(lambda x, r: (jnp.abs(x - r),),
                                     [inputs, reconstructions], 1, **layout)
        # sum(|x-r|/exp(lv) + lv) == sum(|x-r|)/exp(lv) + lv * N
        # NOTE: float32(N) loses integer exactness above 2^24 elements.
        sum_nll = sum_abs * inv_var + logvar * jnp.float32(inputs.size)
        if w is not None:                        # scalar weight: fold in algebra
            sum_nll = w.reshape(()).astype(jnp.float32) * sum_nll
        weighted_nll = sum_nll / batch
    elif tuple(w.shape) == tuple(inputs.shape):
        # Genuinely elementwise weights: stream them alongside x and r.
        sum_abs_w, sum_w = _streaming_sums(
            lambda x, r, ww: (ww * jnp.abs(x - r), ww),
            [inputs, reconstructions, w], 2, **layout)
        weighted_nll = (sum_abs_w * inv_var + logvar * sum_w) / batch
    else:
        # Low-rank broadcastable weights: do NOT materialize to inputs.shape --
        # let XLA fuse the broadcast into a single reduction pass.
        # TODO(synk): could be folded into the Pallas pass with a broadcasting
        # BlockSpec index_map if this path ever dominates.
        x = inputs.astype(jnp.float32)
        r = reconstructions.astype(jnp.float32)
        nll = jnp.abs(x - r) * inv_var + logvar
        weighted_nll = jnp.sum(w.astype(jnp.float32) * nll) / batch

    (sum_kl,) = _streaming_sums(
        lambda m, lv: (m * m + jnp.exp(lv) - 1.0 - lv,),
        [posterior_mean, posterior_logvar], 1, **layout)
    kl_loss = 0.5 * sum_kl / kl_batch

    return weighted_nll + kl_weight * kl_loss


def my_loss_reference(inputs, reconstructions, posterior_mean, posterior_logvar,
                      logvar=0.0, kl_weight=1.0, weights=None):
    """Pure-JAX port of My_loss.forward (f32 math, matching the kernels)."""
    x = inputs.astype(jnp.float32)
    r = reconstructions.astype(jnp.float32)
    lv = jnp.asarray(logvar, jnp.float32)
    nll = jnp.abs(x - r) / jnp.exp(lv) + lv
    if weights is not None:
        nll = jnp.asarray(weights).astype(jnp.float32) * nll
    weighted_nll = jnp.sum(nll) / nll.shape[0]
    m = posterior_mean.astype(jnp.float32)
    plv = posterior_logvar.astype(jnp.float32)
    kl = 0.5 * jnp.sum(m * m + jnp.exp(plv) - 1.0 - plv,
                       axis=tuple(range(1, m.ndim)))
    kl = jnp.sum(kl) / kl.shape[0]
    return weighted_nll + kl_weight * kl


if __name__ == "__main__":
    key = jax.random.PRNGKey(0)
    ks = jax.random.split(key, 12)

    def check(got, want, name):
        got = jax.block_until_ready(got)
        assert jnp.allclose(got, want, rtol=1e-4, atol=1e-3), (name, got, want)

    # Case 1: f32, no weights; small tiles -> 2 exact blocks split across the
    # parallel axis (no edge mask, no guard).  Tiny latents -> XLA KL fallback.
    x1 = jax.random.normal(ks[0], (2, 4, 16, 16), jnp.float32)
    r1 = jax.random.normal(ks[1], (2, 4, 16, 16), jnp.float32)
    m1 = jax.random.normal(ks[2], (2, 4, 8, 8), jnp.float32)
    lv1 = 0.1 * jax.random.normal(ks[3], (2, 4, 8, 8), jnp.float32)
    got1 = my_loss(x1, r1, m1, lv1, logvar=0.0, kl_weight=1.0,
                   block_rows=8, lanes=128, min_pallas_elems=0)
    check(got1, my_loss_reference(x1, r1, m1, lv1), "case1")

    # Case 2: bf16 inputs + elementwise f32 weights + nonzero logvar.
    # rows=34 with 16-row blocks -> 3 real blocks: masked ragged edge block AND
    # a clamped/guarded 2x2 parallel split.  KL latents take the Pallas path.
    x2 = jax.random.normal(ks[4], (2, 4, 34, 16), jnp.float32).astype(jnp.bfloat16)
    r2 = jax.random.normal(ks[5], (2, 4, 34, 16), jnp.float32).astype(jnp.bfloat16)
    w2 = jax.random.uniform(ks[6], (2, 4, 34, 16), dtype=jnp.float32)
    m2 = jax.random.normal(ks[7], (2, 4, 16, 16), jnp.float32)
    lv2 = 0.2 * jax.random.normal(ks[8], (2, 4, 16, 16), jnp.float32)
    got2 = my_loss(x2, r2, m2, lv2, logvar=0.3, kl_weight=0.5, weights=w2,
                   block_rows=8, lanes=128, min_pallas_elems=0)
    check(got2, my_loss_reference(x2, r2, m2, lv2, logvar=0.3, kl_weight=0.5,
                                  weights=w2), "case2")

    # Case 3: default layout parameters (bc=1024 lanes), no weights ->
    # exercises the production tile path; small latents -> XLA bypass.
    x3 = jax.random.normal(ks[9], (2, 4, 96, 96), jnp.float32)
    r3 = jax.random.normal(ks[10], (2, 4, 96, 96), jnp.float32)
    got3 = my_loss(x3, r3, m1, lv1, logvar=-0.2, kl_weight=1.0)
    check(got3, my_loss_reference(x3, r3, m1, lv1, logvar=-0.2, kl_weight=1.0),
          "case3")

    # Case 4: low-rank per-sample weights -> fused-XLA branch (no broadcast
    # materialization, no extra streamed array).
    w4 = jax.random.uniform(ks[11], (2, 1, 1, 1), dtype=jnp.float32)
    got4 = my_loss(x1, r1, m1, lv1, logvar=0.1, kl_weight=2.0, weights=w4,
                   block_rows=8, lanes=128, min_pallas_elems=0)
    check(got4, my_loss_reference(x1, r1, m1, lv1, logvar=0.1, kl_weight=2.0,
                                  weights=w4), "case4")

    print("KERNEL_OK")
</pallas_src>

<mosaic_0001>
module attributes {stable_mosaic.version = 11 : i64} {
  func.func @kernel(%arg0: i32, %arg1: i32, %arg2: memref<8x128xf32, #tpu.memory_space<vmem>>, %arg3: memref<8x128xf32, #tpu.memory_space<vmem>>, %arg4: memref<8x128xf32, #tpu.memory_space<vmem>>) attributes {dimension_semantics = [#tpu.dimension_semantics<parallel>, #tpu.dimension_semantics<arbitrary>], iteration_bounds = array<i64: 2, 1>, scalar_prefetch = 0 : i64, scratch_operands = 0 : i64, tpu.core_type = #tpu.core_type<tc>, window_params = [{transform_indices = @transform_0, window_bounds = array<i64: 8, 128>}, {transform_indices = @transform_1, window_bounds = array<i64: 8, 128>}, {transform_indices = @transform_2, window_bounds = array<i64: 8, 128>}]} {
    %c0_i32 = arith.constant 0 : i32
    %0 = arith.cmpi eq, %arg1, %c0_i32 : i32
    %1 = arith.extui %0 : i1 to i32
    %c0_i32_0 = arith.constant 0 : i32
    %2 = arith.cmpi ne, %1, %c0_i32_0 : i32
    scf.if %2 {
      %cst_8 = arith.constant 0.000000e+00 : f32
      %12 = vector.broadcast %cst_8 : f32 to vector<8x128xf32>
      %c0_9 = arith.constant 0 : index
      %c0_10 = arith.constant 0 : index
      %13 = vector.load %arg4[%c0_9, %c0_10] : memref<8x128xf32, #tpu.memory_space<vmem>>, vector<8x128xf32>
      tpu.vector_store %arg4[%c0_9, %c0_10], %12 {strides = array<i32>} : memref<8x128xf32, #tpu.memory_space<vmem>>, vector<8x128xf32>,
    } else {
    }
    %cst = arith.constant 0.000000e+00 : f32
    %3 = vector.broadcast %cst : f32 to vector<8x128xf32>
    %c0 = arith.constant 0 : index
    %c0_1 = arith.constant 0 : index
    %4 = vector.load %arg2[%c0, %c0_1] : memref<8x128xf32, #tpu.memory_space<vmem>>, vector<8x128xf32>
    %c0_2 = arith.constant 0 : index
    %c0_3 = arith.constant 0 : index
    %5 = vector.load %arg3[%c0_2, %c0_3] : memref<8x128xf32, #tpu.memory_space<vmem>>, vector<8x128xf32>
    %6 = arith.subf %4, %5 : vector<8x128xf32>
    %7 = math.absf %6 : vector<8x128xf32>
    %8 = arith.addf %3, %7 : vector<8x128xf32>
    %c0_4 = arith.constant 0 : index
    %c0_5 = arith.constant 0 : index
    %9 = vector.load %arg4[%c0_4, %c0_5] : memref<8x128xf32, #tpu.memory_space<vmem>>, vector<8x128xf32>
    %10 = arith.addf %9, %8 : vector<8x128xf32>
    %c0_6 = arith.constant 0 : index
    %c0_7 = arith.constant 0 : index
    %11 = vector.load %arg4[%c0_6, %c0_7] : memref<8x128xf32, #tpu.memory_space<vmem>>, vector<8x128xf32>
    tpu.vector_store %arg4[%c0_6, %c0_7], %10 {strides = array<i32>} : memref<8x128xf32, #tpu.memory_space<vmem>>, vector<8x128xf32>,
    return
  }
  func.func @transform_0(%arg0: i32, %arg1: i32) -> (i32, i32) {
    %c1_i32 = arith.constant 1 : i32
    %0 = arith.muli %arg0, %c1_i32 : i32
    %1 = arith.addi %0, %arg1 : i32
    %c0_i32 = arith.constant 0 : i32
    %c0_i32_0 = arith.constant 0 : i32
    return %1, %c0_i32 : i32, i32
  }
  func.func @transform_1(%arg0: i32, %arg1: i32) -> (i32, i32) {
    %c1_i32 = arith.constant 1 : i32
    %0 = arith.muli %arg0, %c1_i32 : i32
    %1 = arith.addi %0, %arg1 : i32
    %c0_i32 = arith.constant 0 : i32
    %c0_i32_0 = arith.constant 0 : i32
    return %1, %c0_i32 : i32, i32
  }
  func.func @transform_2(%arg0: i32, %arg1: i32) -> (i32, i32) {
    %c0_i32 = arith.constant 0 : i32
    %c0_i32_0 = arith.constant 0 : i32
    return %arg0, %c0_i32 : i32, i32
  }
}

</mosaic_0001>

<llo_original>
// kernel: tpu_custom_call.1
$region0: #{tpu_custom_call.1}
  #allocation0 [shape = 'u32[]', space=smem, size = 0x4, offset = 0x4, fixed_abs, tag = 'smem constant byte address 0x4 - core index']
  #allocation1 [shape = 'u32[144,128]{1,0:T(1,128)}', space=vmem, size = 0x12000, scoped, tag = 'internal scratch']
  %s0 = inlined_call_operand.hbm [shape: f32[16,128], index: 0, kind: input, shape index: {}]
  %s1 = inlined_call_operand.hbm [shape: f32[16,128], index: 1, kind: input, shape index: {}]
  %s2 = inlined_call_operand.hbm [shape: f32[16,128], index: 2, kind: output, shape index: {}]
  %s3 = sld [smem:[#allocation0]]
  $region53: #{tpu_custom_call.1} parent=0
    _
  %s5 = ssub.s32 1, %s3
  %s6 = scalar_select 0, %s5, %s3
  $region1: #{tpu_custom_call.1} parent=0
    #allocation2 [shape = 'u8[8192]{0}', space=vmem, size = 0x2000, scoped, tag = 'input window, operand 0']
    #allocation3 [shape = 's32[2]{0}', space=sflag, size = 0x8, scoped, tag = 'scoped memory for tpu_custom_call.1']
    #allocation4 [shape = 's32[2]{0}', space=sflag, size = 0x8, scoped, tag = 'scoped memory for tpu_custom_call.1']
    #allocation5 [shape = 'u8[8192]{0}', space=vmem, size = 0x2000, scoped, tag = 'input window, operand 1']
    #allocation6 [shape = 's32[2]{0}', space=sflag, size = 0x8, scoped, tag = 'scoped memory for tpu_custom_call.1']
    #allocation7 [shape = 'u8[8192]{0}', space=vmem, size = 0x2000, scoped, tag = 'output window, operand 0']
    %7 = vsyncpa [#allocation3], 0
    %s8 = scalar_lea.sflag [#allocation3], 1
    %9 = vsyncpa %s8, 0
    %10 = vsyncpa [#allocation6], 0
    %s11 = scalar_lea.sflag [#allocation6], 1
    %12 = vsyncpa %s11, 0
    %13 = vsyncpa [#allocation4], 0
    %s14 = scalar_lea.sflag [#allocation4], 1
    %15 = vsyncpa %s14, 0
    loop: start=0, step=1, limit=4
    $region2: #{tpu_custom_call.1} parent=1 // loop_pre_header
      _
    $region3: #{tpu_custom_call.1} parent=1 // loop_header
      %s17 = sphi 0, %s21
      %p18 = scmp.ge.s32.totalorder %s17, 4
      %s24 = sphi 0, %s36
      %s25 = sphi 0, %s32
      %s26 = sphi 0, %s24
      %s27 = sphi 0, %s25
      %s28 = sphi 0, %s26
      %s29 = sphi 0, %s27
      %s41 = sphi 0, %s43
      %s44 = sphi 0, %s41
      %s45 = sphi 0, %s44
      %s61 = sphi 0, %s45
      %s69 = sphi 0, %s71
      %s72 = sphi 0, %s69
      %s73 = sphi 0, %s72
      %s89 = sphi 0, %s73
      %s95 = sphi 0, %s97
      %s98 = sphi 0, %s95
      %s99 = sphi 0, %s98
      %s115 = sphi 0, %s99
    $region4: #{tpu_custom_call.1} parent=1 // loop_header_branch
      %20 = sbr.rel (%p18) target = $region8
    $region5: #{tpu_custom_call.1} parent=1 // loop_body
      %s22 = ssub.s32 %s17, 1
      %s23 = ssub.s32 %s17, 2
      %s30 = sadd.s32 1, %s25
      %p31 = scmp.ge.s32.totalorder %s30, 1
      %s32 = scalar_select %p31, 0, %s30
      %s33 = sadd.s32 1, %s24
      %s34 = scalar_select %p31, %s33, %s24
      %p35 = scmp.ge.s32.totalorder %s34, 2
      %s36 = scalar_select %p35, 0, %s34
      %s37 = sadd.s32 %s24, %s25
      %s38 = sadd.s32 %s36, %s32
      %s39 = ssub.s32 %s37, %s38
      %p40 = scmp.eq.s32.totalorder %s39, 0
      %s42 = sadd.s32 %s41, 1
      %s43 = scalar_select %p40, %s41, %s42
      %p46 = pneg %p40
      %p47 = scmp.eq.s32.totalorder %s17, 1
      %p48 = por %p46, %p47
      %p49 = scmp.ne.s32.totalorder %s41, %s44
      %p50 = scmp.eq.s32.totalorder %s17, 0
      %p51 = por %p49, %p50
      %p52 = scmp.ne.s32.totalorder %s41, %s44
      %p53 = scmp.eq.s32.totalorder %s22, 1
      %p54 = por %p52, %p53
      %p55 = scmp.ne.s32.totalorder %s44, %s45
      %p56 = scmp.eq.s32.totalorder %s22, 0
      %p57 = por %p55, %p56
      %p58 = scmp.ne.s32.totalorder %s44, %s45
      %p59 = scmp.eq.s32.totalorder %s23, 1
      %p60 = por %p58, %p59
      %p62 = scmp.ne.s32.totalorder %s45, %s61
      %p63 = scmp.eq.s32.totalorder %s23, 0
      %p64 = por %p62, %p63
      %s65 = sadd.s32 %s24, %s25
      %s66 = sadd.s32 %s36, %s32
      %s67 = ssub.s32 %s65, %s66
      %p68 = scmp.eq.s32.totalorder %s67, 0
      %s70 = sadd.s32 %s69, 1
      %s71 = scalar_select %p68, %s69, %s70
      %p74 = pneg %p68
      %p75 = scmp.eq.s32.totalorder %s17, 1
      %p76 = por %p74, %p75
      %p77 = scmp.ne.s32.totalorder %s69, %s72
      %p78 = scmp.eq.s32.totalorder %s17, 0
      %p79 = por %p77, %p78
      %p80 = scmp.ne.s32.totalorder %s69, %s72
      %p81 = scmp.eq.s32.totalorder %s22, 1
      %p82 = por %p80, %p81
      %p83 = scmp.ne.s32.totalorder %s72, %s73
      %p84 = scmp.eq.s32.totalorder %s22, 0
      %p85 = por %p83, %p84
      %p86 = scmp.ne.s32.totalorder %s72, %s73
      %p87 = scmp.eq.s32.totalorder %s23, 1
      %p88 = por %p86, %p87
      %p90 = scmp.ne.s32.totalorder %s73, %s89
      %p91 = scmp.eq.s32.totalorder %s23, 0
      %p92 = por %p90, %p91
      %s93 = ssub.s32 %s24, %s36
      %p94 = scmp.eq.s32.totalorder %s93, 0
      %s96 = sadd.s32 %s95, 1
      %s97 = scalar_select %p94, %s95, %s96
      %p100 = pneg %p94
      %p101 = scmp.eq.s32.totalorder %s17, 1
      %p102 = por %p100, %p101
      %p103 = scmp.ne.s32.totalorder %s95, %s98
      %p104 = scmp.eq.s32.totalorder %s17, 0
      %p105 = por %p103, %p104
      %p106 = scmp.ne.s32.totalorder %s95, %s98
      %p107 = scmp.eq.s32.totalorder %s22, 1
      %p108 = por %p106, %p107
      %p109 = scmp.ne.s32.totalorder %s98, %s99
      %p110 = scmp.eq.s32.totalorder %s22, 0
      %p111 = por %p109, %p110
      %p112 = scmp.ne.s32.totalorder %s98, %s99
      %p113 = scmp.eq.s32.totalorder %s23, 1
      %p114 = por %p112, %p113
      %p116 = scmp.ne.s32.totalorder %s99, %s115
      %p117 = scmp.eq.s32.totalorder %s23, 0
      %p118 = por %p116, %p117
      %p119 = scmp.le.s32.totalorder 1, %s17
      %p120 = scmp.lt.s32.totalorder %s17, 3
      %p121 = pnand %p119, %p120
      %p122 = pneg %p121
      // Predicated region
      $region9: #{tpu_custom_call.1} parent=5 // pred_check
        _
      $region10: #{tpu_custom_call.1} parent=5 // pred_check_branch
        %124 = sbr.rel (%p121) target = $region12
      $region11: #{tpu_custom_call.1} parent=5 // pred_region
        %s125 = ssub.s32 %s17, 1
      $region12: #{tpu_custom_call.1} parent=5 // pred_fallthru
        _
      %p126 = scmp.lt.s32.totalorder %s17, 2
      // Predicated region
      $region13: #{tpu_custom_call.1} parent=5 // pred_check
        %p127 = pneg %p126
      $region14: #{tpu_custom_call.1} parent=5 // pred_check_branch
        %129 = sbr.rel (%p127) target = $region16
      $region15: #{tpu_custom_call.1} parent=5 // pred_region
        // Predicated region
        $region17: #{tpu_custom_call.1} parent=15 // pred_check
          %p130 = pneg %p51
        $region18: #{tpu_custom_call.1} parent=15 // pred_check_branch
          %132 = sbr.rel (%p130) target = $region20
        $region19: #{tpu_custom_call.1} parent=15 // pred_region
          %s133 = sand.u32 %s41, 1
          %s134 = scalar_lea.sflag [#allocation3], %s133
          %s135 = sand.u32 %s41, 1
          %s136 = smul.addr %s135, 8
          %s137 = scalar_lea.vmem [#allocation2], %s136
          %s138 = sadd.s32 %s24, %s25
          %s140 = ssub.s32 128, 128
          %141 = vsyncadd %s134, %s140
          %s142 = smul.addr %s138, 128
          %s143 = scalar_lea.hbm %s0, %s142
          %s145 = sshll.u32 %s137, 4
          %s146 = int_to_ptr.vmem [resolvable:$true] %s145
          %148 = dma.hbm_to_vmem [thread:$0]  %s143, 128, %s146, %s134
        $region20: #{tpu_custom_call.1} parent=15 // pred_fallthru
          _
        // Predicated region
        $region21: #{tpu_custom_call.1} parent=15 // pred_check
          %p149 = pneg %p79
        $region22: #{tpu_custom_call.1} parent=15 // pred_check_branch
          %151 = sbr.rel (%p149) target = $region24
        $region23: #{tpu_custom_call.1} parent=15 // pred_region
          %s152 = sand.u32 %s69, 1
          %s153 = scalar_lea.sflag [#allocation6], %s152
          %s154 = sand.u32 %s69, 1
          %s155 = smul.addr %s154, 8
          %s156 = scalar_lea.vmem [#allocation5], %s155
          %s157 = sadd.s32 %s24, %s25
          %s159 = ssub.s32 128, 128
          %160 = vsyncadd %s153, %s159
          %s161 = smul.addr %s157, 128
          %s162 = scalar_lea.hbm %s1, %s161
          %s164 = sshll.u32 %s156, 4
          %s165 = int_to_ptr.vmem [resolvable:$true] %s164
          %167 = dma.hbm_to_vmem [thread:$0]  %s162, 128, %s165, %s153
        $region24: #{tpu_custom_call.1} parent=15 // pred_fallthru
          _
      $region16: #{tpu_custom_call.1} parent=5 // pred_fallthru
        _
      %p168 = scmp.le.s32.totalorder 1, %s17
      %p169 = scmp.lt.s32.totalorder %s17, 3
      %p170 = pnand %p168, %p169
      %p171 = pneg %p170
      // Predicated region
      $region25: #{tpu_custom_call.1} parent=5 // pred_check
        _
      $region26: #{tpu_custom_call.1} parent=5 // pred_check_branch
        %173 = sbr.rel (%p170) target = $region28
      $region27: #{tpu_custom_call.1} parent=5 // pred_region
        %s174 = ssub.s32 %s17, 1
        %s175 = sand.u32 %s44, 1
        %s176 = scalar_lea.sflag [#allocation3], %s175
        %s177 = sand.u32 %s44, 1
        %s178 = smul.addr %s177, 8
        %s179 = scalar_lea.vmem [#allocation2], %s178
        // Predicated region
        $region29: #{tpu_custom_call.1} parent=27 // pred_check
          %p180 = pneg %p57
        $region30: #{tpu_custom_call.1} parent=27 // pred_check_branch
          %182 = sbr.rel (%p180) target = $region32
        $region31: #{tpu_custom_call.1} parent=27 // pred_region
          %183 = dma.done %s176, 128
        $region32: #{tpu_custom_call.1} parent=27 // pred_fallthru
          _
        %s184 = sand.u32 %s72, 1
        %s185 = scalar_lea.sflag [#allocation6], %s184
        %s186 = sand.u32 %s72, 1
        %s187 = smul.addr %s186, 8
        %s188 = scalar_lea.vmem [#allocation5], %s187
        // Predicated region
        $region33: #{tpu_custom_call.1} parent=27 // pred_check
          %p189 = pneg %p85
        $region34: #{tpu_custom_call.1} parent=27 // pred_check_branch
          %191 = sbr.rel (%p189) target = $region36
        $region35: #{tpu_custom_call.1} parent=27 // pred_region
          %192 = dma.done %s185, 128
        $region36: #{tpu_custom_call.1} parent=27 // pred_fallthru
          _
        %s193 = sand.u32 %s44, 1
        %s194 = scalar_lea.sflag [#allocation3], %s193
        %s195 = sand.u32 %s44, 1
        %s196 = smul.addr %s195, 8
        %s197 = scalar_lea.vmem [#allocation2], %s196
        %p198 = pneg %p57
        %p199 = pneg %p54
        %s200 = sand.u32 %s72, 1
        %s201 = scalar_lea.sflag [#allocation6], %s200
        %s202 = sand.u32 %s72, 1
        %s203 = smul.addr %s202, 8
        %s204 = scalar_lea.vmem [#allocation5], %s203
        %p205 = pneg %p85
        %p206 = pneg %p82
        %p207 = pneg %p111
        %p208 = pneg %p108
        %s209 = sand.u32 %s98, 1
        %s210 = scalar_lea.sflag [#allocation4], %s209
        %s211 = sand.u32 %s98, 1
        %s212 = smul.addr %s211, 8
        %s213 = scalar_lea.vmem [#allocation7], %s212
        %s214 = sadd.s32 %s26, %s27
        %s215 = sadd.s32 %s26, %s27
        %p216 = scmp.eq.s32.totalorder %s27, 0
        // Predicated region
        $region37: #{tpu_custom_call.1} parent=27 // pred_check
          %p217 = pneg %p216
        $region38: #{tpu_custom_call.1} parent=27 // pred_check_branch
          %219 = sbr.rel (%p217) target = $region40
        $region39: #{tpu_custom_call.1} parent=27 // pred_region
          %220 = vst [vmem:[%s213] sm:$0xff] 0.0
        $region40: #{tpu_custom_call.1} parent=27 // pred_fallthru
          _
        %v221 = vld [vmem:[%s179] sm:$0xff]
        %v222 = vld [vmem:[%s188] sm:$0xff]
        %v223 = vsub.f32 %v221, %v222
        %v224 = vand.u32 2147483647, %v223
        %v225 = vadd.f32 %v224, 0.0
        %v226 = vld [vmem:[%s213] sm:$0xff]
        %v227 = vadd.f32 %v226, %v225
        %228 = vst [vmem:[%s213] sm:$0xff] %v227
        %s229 = sand.u32 %s98, 1
        %s230 = scalar_lea.sflag [#allocation4], %s229
        %s231 = sand.u32 %s98, 1
        %s232 = smul.addr %s231, 8
        %s233 = scalar_lea.vmem [#allocation7], %s232
        // Predicated region
        $region41: #{tpu_custom_call.1} parent=27 // pred_check
          %p234 = pneg %p108
        $region42: #{tpu_custom_call.1} parent=27 // pred_check_branch
          %236 = sbr.rel (%p234) target = $region44
        $region43: #{tpu_custom_call.1} parent=27 // pred_region
          %s238 = ssub.s32 128, 128
          %239 = vsyncadd %s230, %s238
          %s240 = smul.addr %s26, 128
          %s241 = scalar_lea.hbm %s2, %s240
          %s243 = sshll.u32 %s233, 4
          %s244 = int_to_ptr.vmem [resolvable:$true] %s243
          %246 = dma.vmem_to_hbm [thread:$0]  %s244, 128, %s241, %s230
        $region44: #{tpu_custom_call.1} parent=27 // pred_fallthru
          _
      $region28: #{tpu_custom_call.1} parent=5 // pred_fallthru
        _
      %p247 = scmp.le.s32.totalorder 2, %s17
      // Predicated region
      $region45: #{tpu_custom_call.1} parent=5 // pred_check
        %p248 = pneg %p247
      $region46: #{tpu_custom_call.1} parent=5 // pred_check_branch
        %250 = sbr.rel (%p248) target = $region48
      $region47: #{tpu_custom_call.1} parent=5 // pred_region
        %s251 = ssub.s32 %s17, 2
        // Predicated region
        $region49: #{tpu_custom_call.1} parent=47 // pred_check
          %p252 = pneg %p114
        $region50: #{tpu_custom_call.1} parent=47 // pred_check_branch
          %254 = sbr.rel (%p252) target = $region52
        $region51: #{tpu_custom_call.1} parent=47 // pred_region
          %s255 = sand.u32 %s99, 1
          %s256 = scalar_lea.sflag [#allocation4], %s255
          %s257 = sand.u32 %s99, 1
          %s258 = smul.addr %s257, 8
          %s259 = scalar_lea.vmem [#allocation7], %s258
          %260 = dma.done %s256, 128
        $region52: #{tpu_custom_call.1} parent=47 // pred_fallthru
          _
      $region48: #{tpu_custom_call.1} parent=5 // pred_fallthru
        _
    $region6: #{tpu_custom_call.1} parent=1 // loop_footer
      %s21 = sadd.s32 1, %s17
    $region7: #{tpu_custom_call.1} parent=1 // loop_footer_branch
      %16 = sbr.rel target = $region3
    $region8: #{tpu_custom_call.1} parent=1 // loop_exit
      _
    %261 = vsyncpa [#allocation3], 1
    %s262 = scalar_lea.sflag [#allocation3], 1
    %263 = vsyncpa %s262, 1
    %264 = vsyncpa [#allocation6], 1
    %s265 = scalar_lea.sflag [#allocation6], 1
    %266 = vsyncpa %s265, 1
    %267 = vsyncpa [#allocation4], 1
    %s268 = scalar_lea.sflag [#allocation4], 1
    %269 = vsyncpa %s268, 1

</llo_original>
